<compile_context>
chip_gen: v6e
topology: v6e:2x2x1
jax: 0.10.0
libtpu: 0.0.40
codegen_flags: <defaults>
</compile_context>

<pallas_src>
import functools

import jax
import jax.numpy as jnp
from jax.experimental import pallas as pl
from jax.experimental.pallas import tpu as pltpu


def _gap1d_kernel_single(x_ref, o_ref, *, inv_c):
    """Whole C fits in one block: x_ref (B_TILE, C, L_TILE) -> o_ref (B_TILE, L_TILE)."""
    s = jnp.sum(x_ref[...].astype(jnp.float32), axis=1)
    o_ref[...] = (s * inv_c).astype(o_ref.dtype)


def _gap1d_kernel_multi(x_ref, o_ref, acc_ref, *, inv_c):
    """x_ref: (B_TILE, C_TILE, L_TILE); o_ref: (B_TILE, L_TILE); acc_ref f32."""
    k = pl.program_id(2)

    @pl.when(k == 0)
    def _():
        acc_ref[...] = jnp.zeros_like(acc_ref)

    # Accumulate partial channel-sums in f32 (VPU adds; lane axis stays dense).
    acc_ref[...] += jnp.sum(x_ref[...].astype(jnp.float32), axis=1)

    @pl.when(k == pl.num_programs(2) - 1)
    def _():
        # Divide by the FULL channel count (not C_TILE), then cast once.
        o_ref[...] = (acc_ref[...] * inv_c).astype(o_ref.dtype)


def _pick_tile(dim, mult, target):
    """Largest divisor of `dim` that is a multiple of `mult` and <= max(target, mult).

    Falls back to the full dim when `dim` is not a multiple of `mult`
    (a full-extent block always satisfies the TPU (8, 128) tiling rule).
    """
    if dim % mult != 0:
        return dim
    cap = min(dim, max(target, mult))
    best = mult
    t = mult
    while t <= cap:
        if dim % t == 0:
            best = t
        t += mult
    return best


def cus_gap1d(x, *, l_tile_target=512, vmem_budget_bytes=8 * 1024 * 1024):
    """Mean over axis -2 with keepdim, computed in a Pallas TPU kernel."""
    B, C, L = x.shape
    itemsize = jnp.dtype(x.dtype).itemsize
    sublane_mult = {4: 8, 2: 16, 1: 32}.get(itemsize, 8)

    # Lane axis: multiples of 128; 512 is the measured mem-bound sweet spot.
    l_tile = _pick_tile(L, 128, l_tile_target)
    # Fold a few batches per tile to amortize ~0.35us/grid-step overhead and
    # keep the 2-D output block sublane-dense.
    b_tile = 8 if (B >= 8 and B % 8 == 0) else B
    # Reduction tile over C, bounded so the double-buffered input tile stays
    # within a conservative VMEM budget (portable across v5e/v6e/v7x defaults).
    max_c = max(1, vmem_budget_bytes // (2 * b_tile * l_tile * itemsize))
    c_tile = _pick_tile(C, sublane_mult, max_c)

    grid = (B // b_tile, L // l_tile, C // c_tile)
    single_pass = grid[2] == 1

    if single_pass:
        kernel = functools.partial(_gap1d_kernel_single, inv_c=1.0 / C)
        scratch_shapes = []
    else:
        kernel = functools.partial(_gap1d_kernel_multi, inv_c=1.0 / C)
        scratch_shapes = [pltpu.VMEM((b_tile, l_tile), jnp.float32)]

    out2d = pl.pallas_call(
        kernel,
        out_shape=jax.ShapeDtypeStruct((B, L), x.dtype),
        grid_spec=pltpu.PrefetchScalarGridSpec(
            num_scalar_prefetch=0,
            grid=grid,
            in_specs=[
                pl.BlockSpec((b_tile, c_tile, l_tile), lambda b, l, k: (b, k, l)),
            ],
            out_specs=pl.BlockSpec((b_tile, l_tile), lambda b, l, k: (b, l)),
            scratch_shapes=scratch_shapes,
        ),
        compiler_params=pltpu.CompilerParams(
            dimension_semantics=("parallel", "parallel", "arbitrary"),
        ),
        cost_estimate=pl.CostEstimate(
            flops=B * C * L,
            transcendentals=0,
            bytes_accessed=x.size * itemsize + B * L * itemsize,
        ),
    )(x)

    return out2d.reshape(B, 1, L)


if __name__ == "__main__":
    key = jax.random.PRNGKey(0)

    # Small shape consistent with a (B, C, L) 1d feature map (single-pass path,
    # full-extent blocks since neither C nor L is tile-aligned).
    B, C, L = 2, 4, 16
    x = jax.random.normal(key, (B, C, L), dtype=jnp.float32)

    y = jax.block_until_ready(cus_gap1d(x))
    y_ref = jnp.mean(x, axis=-2, keepdims=True)
    assert y.shape == (B, 1, L), y.shape
    assert jnp.allclose(y, y_ref, atol=1e-6, rtol=1e-6), "mismatch vs reference"

    # Second case: exercises the batch-fold / lane-tile / multi-step
    # C-reduction accumulator path (tiny VMEM budget forces C_TILE < C).
    B2, C2, L2 = 8, 32, 256
    x2 = jax.random.normal(jax.random.PRNGKey(0), (B2, C2, L2), dtype=jnp.float32)
    y2 = jax.block_until_ready(
        cus_gap1d(x2, vmem_budget_bytes=2 * 8 * 256 * 4 * 8)
    )
    y2_ref = jnp.mean(x2, axis=-2, keepdims=True)
    assert y2.shape == (B2, 1, L2), y2.shape
    assert jnp.allclose(y2, y2_ref, atol=1e-5, rtol=1e-5), "mismatch vs reference (tiled)"

    # Third case: bf16 input (sublane packing 16, f32 accumulation, final cast).
    B3, C3, L3 = 4, 16, 128
    x3 = jax.random.normal(jax.random.PRNGKey(0), (B3, C3, L3)).astype(jnp.bfloat16)
    y3 = jax.block_until_ready(cus_gap1d(x3))
    y3_ref = jnp.mean(x3.astype(jnp.float32), axis=-2, keepdims=True)
    assert y3.shape == (B3, 1, L3), y3.shape
    assert jnp.allclose(y3.astype(jnp.float32), y3_ref, atol=2e-2, rtol=2e-2), (
        "mismatch vs reference (bf16)"
    )

    print("KERNEL_OK")
</pallas_src>

<mosaic_0001>
module attributes {stable_mosaic.version = 11 : i64} {
  func.func @_gap1d_kernel_single(%arg0: i32, %arg1: i32, %arg2: i32, %arg3: memref<2x4x16xf32, #tpu.memory_space<vmem>>, %arg4: memref<2x16xf32, #tpu.memory_space<vmem>>) attributes {dimension_semantics = [#tpu.dimension_semantics<parallel>, #tpu.dimension_semantics<parallel>, #tpu.dimension_semantics<arbitrary>], iteration_bounds = array<i64: 1, 1, 1>, scalar_prefetch = 0 : i64, scratch_operands = 0 : i64, tpu.core_type = #tpu.core_type<tc>, window_params = [{transform_indices = @transform_0, window_bounds = array<i64: 2, 4, 16>}, {transform_indices = @transform_1, window_bounds = array<i64: 2, 16>}]} {
    %c0 = arith.constant 0 : index
    %c0_0 = arith.constant 0 : index
    %c0_1 = arith.constant 0 : index
    %0 = vector.load %arg3[%c0, %c0_0, %c0_1] : memref<2x4x16xf32, #tpu.memory_space<vmem>>, vector<2x4x16xf32>
    %cst = arith.constant dense<0.000000e+00> : vector<2x16xf32>
    %1 = vector.multi_reduction <add>, %0, %cst [1] : vector<2x4x16xf32> to vector<2x16xf32>
    %cst_2 = arith.constant 2.500000e-01 : f32
    %2 = vector.broadcast %cst_2 : f32 to vector<2x16xf32>
    %3 = arith.mulf %1, %2 : vector<2x16xf32>
    %c0_3 = arith.constant 0 : index
    %c0_4 = arith.constant 0 : index
    %4 = vector.load %arg4[%c0_3, %c0_4] : memref<2x16xf32, #tpu.memory_space<vmem>>, vector<2x16xf32>
    tpu.vector_store %arg4[%c0_3, %c0_4], %3 {strides = array<i32>} : memref<2x16xf32, #tpu.memory_space<vmem>>, vector<2x16xf32>,
    return
  }
  func.func @transform_0(%arg0: i32, %arg1: i32, %arg2: i32) -> (i32, i32, i32) {
    %c0_i32 = arith.constant 0 : i32
    return %arg0, %arg2, %arg1 : i32, i32, i32
  }
  func.func @transform_1(%arg0: i32, %arg1: i32, %arg2: i32) -> (i32, i32) {
    %c0_i32 = arith.constant 0 : i32
    return %arg0, %arg1 : i32, i32
  }
}

</mosaic_0001>

<llo_original>
// kernel: tpu_custom_call.1
$region0: #{tpu_custom_call.1}
  #allocation0 [shape = 'u32[]', space=smem, size = 0x4, offset = 0x4, fixed_abs, tag = 'smem constant byte address 0x4 - core index']
  #allocation1 [shape = 'u32[144,128]{1,0:T(1,128)}', space=vmem, size = 0x12000, scoped, tag = 'internal scratch']
  %s0 = inlined_call_operand.hbm [shape: f32[2,4,16], index: 0, kind: input, shape index: {}]
  %s1 = inlined_call_operand.hbm [shape: f32[2,16], index: 1, kind: output, shape index: {}]
  %s2 = sld [smem:[#allocation0]]
  $region18: #{tpu_custom_call.1} parent=0
    _
  %s4 = ssub.s32 1, %s2
  %s5 = scalar_select 0, %s4, %s2
  $region1: #{tpu_custom_call.1} parent=0
    #allocation2 [shape = 'u8[4096]{0}', space=vmem, size = 0x1000, scoped, tag = 'input window, operand 0, single buffered']
    #allocation3 [shape = 's32[1]{0}', space=sflag, size = 0x4, scoped, tag = 'scoped memory for tpu_custom_call.1']
    #allocation4 [shape = 's32[1]{0}', space=sflag, size = 0x4, scoped, tag = 'scoped memory for tpu_custom_call.1']
    #allocation5 [shape = 'u8[1024]{0}', space=vmem, size = 0x400, scoped, tag = 'output window, operand 0, single buffered']
    %6 = vsyncpa [#allocation3], 0
    %7 = vsyncpa [#allocation4], 0
    // Predicated region
    $region2: #{tpu_custom_call.1} parent=1 // pred_check
      _
    $region3: #{tpu_custom_call.1} parent=1 // pred_check_branch
      %9 = sbr.rel (0) target = $region5
    $region4: #{tpu_custom_call.1} parent=1 // pred_region
      %s11 = ssub.s32 128, 128
      %12 = vsyncadd [#allocation3], %s11
      %s13 = sshll.u32 [#allocation2], 4
      %s14 = int_to_ptr.vmem [resolvable:$true] %s13
      %19 = dma.hbm_to_vmem [thread:$0]  %s0, 128, %s14, [#allocation3], 64, 64, 4
    $region5: #{tpu_custom_call.1} parent=1 // pred_fallthru
      _
    // Predicated region
    $region6: #{tpu_custom_call.1} parent=1 // pred_check
      _
    $region7: #{tpu_custom_call.1} parent=1 // pred_check_branch
      %21 = sbr.rel (0) target = $region9
    $region8: #{tpu_custom_call.1} parent=1 // pred_region
      %22 = dma.done [#allocation3], 128
    $region9: #{tpu_custom_call.1} parent=1 // pred_fallthru
      _
    %v23 = vld [vmem:[#allocation2] sm:$0xf]
    %v24 = vld [vmem:[#allocation2 + $0x4] sm:$0xf]
    %vm25 = vcmask 125952
    %v26 = vsel %vm25, %v23, 0.0
    %v27 = vrot.slane %v26, 4
    %v28 = vadd.f32 %v26, %v27
    %v29 = vrot.slane %v28, 2
    %v30 = vadd.f32 %v28, %v29
    %v31 = vrot.slane %v30, 1
    %v32 = vadd.f32 %v30, %v31
    %v33 = vsel %vm25, %v24, 0.0
    %v34 = vrot.slane %v33, 4
    %v35 = vadd.f32 %v33, %v34
    %v36 = vrot.slane %v35, 2
    %v37 = vadd.f32 %v35, %v36
    %v38 = vrot.slane %v37, 1
    %v39 = vadd.f32 %v37, %v38
    %v40 = vmul.f32 %v32, 0.25
    %v41 = vmul.f32 %v39, 0.25
    %vm44 = vcmask 1041409
    %v45 = vsel %vm44, %v41, %v40
    %vm47 = vcmask 123904
    %48 = vst.msk [vmem:[#allocation5] sm:$0x3] %vm47, %v45
    // Predicated region
    $region10: #{tpu_custom_call.1} parent=1 // pred_check
      _
    $region11: #{tpu_custom_call.1} parent=1 // pred_check_branch
      %50 = sbr.rel (0) target = $region13
    $region12: #{tpu_custom_call.1} parent=1 // pred_region
      %s52 = ssub.s32 32, 32
      %53 = vsyncadd [#allocation4], %s52
      %s55 = sshll.u32 [#allocation5], 4
      %s56 = int_to_ptr.vmem [resolvable:$true] %s55
      %58 = dma.vmem_to_hbm [thread:$0]  %s56, 32, %s1, [#allocation4]
    $region13: #{tpu_custom_call.1} parent=1 // pred_fallthru
      _
    // Predicated region
    $region14: #{tpu_custom_call.1} parent=1 // pred_check
      _
    $region15: #{tpu_custom_call.1} parent=1 // pred_check_branch
      %60 = sbr.rel (0) target = $region17
    $region16: #{tpu_custom_call.1} parent=1 // pred_region
      %61 = dma.done [#allocation4], 32
    $region17: #{tpu_custom_call.1} parent=1 // pred_fallthru
      _
    %62 = vsyncpa [#allocation3], 1
    %63 = vsyncpa [#allocation4], 1

</llo_original>
